<compile_context>
chip_gen: v7x
topology: tpu7x:2x2x1
jax: 0.10.0
libtpu: 0.0.40
codegen_flags: <defaults>
</compile_context>

<pallas_src>
import functools

import jax
import jax.numpy as jnp
from jax.experimental import pallas as pl
from jax.experimental.pallas import tpu as pltpu

# Safe in float32; re-check logsumexp math before switching logits to bf16.
_NEG_INF = -1e30


def _round_up(x, m):
    return (x + m - 1) // m * m


def _embed_logits(idx_ref, table_ref):
    """Embedding lookup as one-hot @ table on the MXU.

    idx_ref:   (TBT, 1)     int32 token ids (padded tail rows hold 0)
    table_ref: (Vpad, Vpad) f32 table; pad columns pre-filled with -1e30
    returns (col iota (TBT, Vpad), logits (TBT, Vpad) f32)
    """
    tbt = idx_ref.shape[0]
    vpad = table_ref.shape[0]
    col = jax.lax.broadcasted_iota(jnp.int32, (tbt, vpad), 1)
    onehot = (col == idx_ref[...]).astype(jnp.float32)
    logits = jnp.dot(onehot, table_ref[...], preferred_element_type=jnp.float32)
    return col, logits


def _ce_block_sum(col, logits, tgt_ref, bt_valid):
    """Sum of per-row cross-entropy losses in this block; pad rows masked to 0."""
    # Padded class lanes already hold -1e30 (baked into the table padding), so
    # no compare+select column mask is needed here.
    m = jnp.max(logits, axis=-1, keepdims=True)                               # (TBT,1)
    lse = m + jnp.log(jnp.sum(jnp.exp(logits - m), axis=-1, keepdims=True))   # (TBT,1)
    picked = jnp.sum(jnp.where(col == tgt_ref[...], logits, 0.0),
                     axis=-1, keepdims=True)                                  # (TBT,1)
    row_loss = lse - picked
    tbt = row_loss.shape[0]
    grow = (pl.program_id(0) * tbt
            + jax.lax.broadcasted_iota(jnp.int32, (tbt, 1), 0))
    row_loss = jnp.where(grow < bt_valid, row_loss, 0.0)    # mask padded tail rows
    return jnp.sum(row_loss, axis=0, keepdims=True)         # (1, 1)


def _bigram_logits_kernel(idx_ref, table_ref, logits_ref):
    # Inference path: embedding gather only.
    _, logits = _embed_logits(idx_ref, table_ref)
    logits_ref[...] = logits


def _bigram_loss_logits_kernel(idx_ref, tgt_ref, table_ref,
                               logits_ref, loss_ref, *, bt_valid):
    # Training path: embedding gather + per-block cross-entropy partial sum.
    col, logits = _embed_logits(idx_ref, table_ref)
    logits_ref[...] = logits
    blk = _ce_block_sum(col, logits, tgt_ref, bt_valid)          # (1,1)
    # Splat the block sum across one lane-dense (8,128) tile (unmasked vst).
    loss_ref[...] = jnp.zeros(loss_ref.shape, jnp.float32) + blk


def _bigram_loss_only_kernel(idx_ref, tgt_ref, table_ref, loss_ref, *, bt_valid):
    # Loss-only training path: no logits writeback at all.
    col, logits = _embed_logits(idx_ref, table_ref)
    blk = _ce_block_sum(col, logits, tgt_ref, bt_valid)          # (1,1)
    loss_ref[...] = jnp.zeros(loss_ref.shape, jnp.float32) + blk


def bigram_forward(idx, table, targets=None, *, row_tile=2048,
                   return_logits=True, padded_logits=False):
    """Forward pass of BiagramLanguageModel.

    idx:     (B, T) int token ids
    table:   (V, V) float32 embedding table
    targets: optional (B, T) int

    Returns (logits, loss):
      targets is None            -> logits (B, T, V),  loss None
      targets given              -> logits (B*T, V),   loss scalar (PyTorch .view)
      targets given, return_logits=False -> (None, loss)  # fast training mode
      padded_logits=True returns the class axis padded to 128 (padded lanes
      hold -1e30); skips an extra HBM pass in the wrapper.
    """
    B, T = idx.shape
    V = table.shape[0]
    BT = B * T

    Vpad = _round_up(V, 128)       # lane-dense class axis (do NOT pad to 256)

    # Large row tiles amortize the ~0.35us per-grid-step overhead; cap at 8192
    # rows so double-buffered logits blocks stay within v5e's 16 MiB scoped
    # VMEM default (8192*128*4B*2 ~= 8 MiB).
    row_tile = min(row_tile, 8192)
    TBT = min(_round_up(row_tile, 8), _round_up(BT, 8))
    # Prefer >= 2 row blocks so the "parallel" grid axis can shard across the
    # two TensorCores on v7x (no effect on single-TC v5e/v6e).
    if _round_up(BT, TBT) // TBT < 2 and TBT > 8:
        TBT = _round_up((TBT + 1) // 2, 8)
    BT_pad = _round_up(BT, TBT)
    nblk = BT_pad // TBT

    # Zero-padded table with pad *columns* pre-filled with -1e30: padded class
    # lanes never win the max nor contribute to logsumexp.
    table_pad = jnp.zeros((Vpad, Vpad), jnp.float32)
    table_pad = table_pad.at[:V, :V].set(table.astype(jnp.float32))
    table_pad = table_pad.at[:, V:].set(_NEG_INF)

    idx_flat = jnp.zeros((BT_pad, 1), jnp.int32).at[:BT, 0].set(
        idx.reshape(BT).astype(jnp.int32))

    ids_spec = pl.BlockSpec((TBT, 1), lambda i: (i, 0))
    table_spec = pl.BlockSpec((Vpad, Vpad), lambda i: (0, 0))     # resident 64 KiB
    logits_spec = pl.BlockSpec((TBT, Vpad), lambda i: (i, 0))
    loss_spec = pl.BlockSpec((8, 128), lambda i: (i, 0))          # one lane-dense tile/block
    params = pltpu.CompilerParams(dimension_semantics=("parallel",))

    def _trim(logits_pad):
        logits = logits_pad[:BT]          # contiguous row slice only
        if not padded_logits:
            logits = logits[:, :V]        # extra HBM pass; avoid via padded_logits=True
        return logits

    if targets is None:
        logits_pad = pl.pallas_call(
            _bigram_logits_kernel,
            out_shape=jax.ShapeDtypeStruct((BT_pad, Vpad), jnp.float32),
            grid=(nblk,),
            in_specs=[ids_spec, table_spec],
            out_specs=logits_spec,
            compiler_params=params,
        )(idx_flat, table_pad)
        logits = _trim(logits_pad)
        return logits.reshape(B, T, logits.shape[-1]), None

    tgt_flat = jnp.zeros((BT_pad, 1), jnp.int32).at[:BT, 0].set(
        targets.reshape(BT).astype(jnp.int32))
    loss_shape = jax.ShapeDtypeStruct((nblk * 8, 128), jnp.float32)

    if return_logits:
        logits_pad, blk_loss = pl.pallas_call(
            functools.partial(_bigram_loss_logits_kernel, bt_valid=BT),
            out_shape=(jax.ShapeDtypeStruct((BT_pad, Vpad), jnp.float32),
                       loss_shape),
            grid=(nblk,),
            in_specs=[ids_spec, ids_spec, table_spec],
            out_specs=(logits_spec, loss_spec),
            compiler_params=params,
        )(idx_flat, tgt_flat, table_pad)
        loss = jnp.sum(blk_loss[::8, 0]) / BT   # one splatted sum per block
        return _trim(logits_pad), loss

    blk_loss = pl.pallas_call(
        functools.partial(_bigram_loss_only_kernel, bt_valid=BT),
        out_shape=loss_shape,
        grid=(nblk,),
        in_specs=[ids_spec, ids_spec, table_spec],
        out_specs=loss_spec,
        compiler_params=params,
    )(idx_flat, tgt_flat, table_pad)
    return None, jnp.sum(blk_loss[::8, 0]) / BT


if __name__ == "__main__":
    key = jax.random.PRNGKey(0)
    k_table, k_idx, k_tgt = jax.random.split(key, 3)

    vocab_size = 65   # tinyshakespeare-style vocab
    B, T = 2, 8

    # nn.Embedding default init ~ N(0, 1), deterministic here.
    table = jax.random.normal(k_table, (vocab_size, vocab_size), dtype=jnp.float32)
    idx = jax.random.randint(k_idx, (B, T), 0, vocab_size, dtype=jnp.int32)
    targets = jax.random.randint(k_tgt, (B, T), 0, vocab_size, dtype=jnp.int32)

    # Training path (logits + loss), fast loss-only path, inference path.
    logits, loss = bigram_forward(idx, table, targets)
    _, loss_only = bigram_forward(idx, table, targets, return_logits=False)
    logits_inf, loss_inf = bigram_forward(idx, table, None)
    jax.block_until_ready((logits, loss, loss_only, logits_inf))

    # Pure-JAX reference (embedding gather + mean cross-entropy).
    ref_logits = table[idx.reshape(-1)]                                  # (B*T, V)
    ref_lse = jax.scipy.special.logsumexp(ref_logits, axis=-1)           # (B*T,)
    ref_loss = jnp.mean(ref_lse - ref_logits[jnp.arange(B * T), targets.reshape(-1)])

    assert logits.shape == (B * T, vocab_size)
    assert jnp.allclose(logits, ref_logits, atol=1e-5, rtol=1e-5)
    assert jnp.allclose(loss, ref_loss, atol=1e-5, rtol=1e-5)
    assert jnp.allclose(loss_only, ref_loss, atol=1e-5, rtol=1e-5)
    assert logits_inf.shape == (B, T, vocab_size)
    assert loss_inf is None
    assert jnp.allclose(logits_inf.reshape(B * T, vocab_size), ref_logits,
                        atol=1e-5, rtol=1e-5)

    print("KERNEL_OK")
</pallas_src>

<mosaic_0001>
module attributes {stable_mosaic.version = 11 : i64} {
  func.func @_bigram_loss_logits_kernel(%arg0: i32, %arg1: memref<8x1xi32, #tpu.memory_space<vmem>>, %arg2: memref<8x1xi32, #tpu.memory_space<vmem>>, %arg3: memref<128x128xf32, #tpu.memory_space<vmem>>, %arg4: memref<8x128xf32, #tpu.memory_space<vmem>>, %arg5: memref<8x128xf32, #tpu.memory_space<vmem>>) attributes {dimension_semantics = [#tpu.dimension_semantics<parallel>], iteration_bounds = array<i64: 2>, scalar_prefetch = 0 : i64, scratch_operands = 0 : i64, tpu.core_type = #tpu.core_type<tc>, window_params = [{transform_indices = @transform_0, window_bounds = array<i64: 8, 1>}, {transform_indices = @transform_1, window_bounds = array<i64: 8, 1>}, {pipeline_mode = #tpu.pipeline_mode<synchronous>, transform_indices = @transform_2, window_bounds = array<i64: 128, 128>}, {transform_indices = @transform_3, window_bounds = array<i64: 8, 128>}, {transform_indices = @transform_4, window_bounds = array<i64: 8, 128>}]} {
    %0 = tpu.iota {dimensions = array<i32: 1>} : vector<8x128xi32>
    %c0 = arith.constant 0 : index
    %c0_0 = arith.constant 0 : index
    %1 = vector.load %arg1[%c0, %c0_0] : memref<8x1xi32, #tpu.memory_space<vmem>>, vector<8x1xi32>
    %2 = vector.broadcast %1 : vector<8x1xi32> to vector<8x128xi32>
    %3 = arith.cmpi eq, %0, %2 : vector<8x128xi32>
    %4 = arith.extui %3 : vector<8x128xi1> to vector<8x128xi32>
    %5 = arith.sitofp %4 : vector<8x128xi32> to vector<8x128xf32>
    %c0_1 = arith.constant 0 : index
    %c0_2 = arith.constant 0 : index
    %6 = vector.load %arg3[%c0_1, %c0_2] : memref<128x128xf32, #tpu.memory_space<vmem>>, vector<128x128xf32>
    %cst = arith.constant dense<0.000000e+00> : vector<8x128xf32>
    %7 = tpu.matmul %5, %6, %cst {dimension_numbers = #tpu.dot_dimension_numbers<[1], [0], [0], [1], [0, 0, 1, 1], [], []>} : vector<8x128xf32>, vector<128x128xf32>, vector<8x128xf32> -> vector<8x128xf32>
    %c0_3 = arith.constant 0 : index
    %c0_4 = arith.constant 0 : index
    %8 = vector.load %arg4[%c0_3, %c0_4] : memref<8x128xf32, #tpu.memory_space<vmem>>, vector<8x128xf32>
    tpu.vector_store %arg4[%c0_3, %c0_4], %7 {strides = array<i32>} : memref<8x128xf32, #tpu.memory_space<vmem>>, vector<8x128xf32>,
    %cst_5 = arith.constant dense<0xFF800000> : vector<8xf32>
    %9 = vector.multi_reduction <maximumf>, %7, %cst_5 [1] : vector<8x128xf32> to vector<8xf32>
    %10 = vector.shape_cast %9 : vector<8xf32> to vector<8x1xf32>
    %11 = vector.broadcast %10 : vector<8x1xf32> to vector<8x128xf32>
    %12 = arith.subf %7, %11 : vector<8x128xf32>
    %13 = math.exp %12 : vector<8x128xf32>
    %cst_6 = arith.constant dense<0.000000e+00> : vector<8xf32>
    %14 = vector.multi_reduction <add>, %13, %cst_6 [1] : vector<8x128xf32> to vector<8xf32>
    %15 = vector.shape_cast %14 : vector<8xf32> to vector<8x1xf32>
    %16 = math.log %15 : vector<8x1xf32>
    %17 = arith.addf %10, %16 : vector<8x1xf32>
    %c0_7 = arith.constant 0 : index
    %c0_8 = arith.constant 0 : index
    %18 = vector.load %arg2[%c0_7, %c0_8] : memref<8x1xi32, #tpu.memory_space<vmem>>, vector<8x1xi32>
    %19 = vector.broadcast %18 : vector<8x1xi32> to vector<8x128xi32>
    %20 = arith.cmpi eq, %0, %19 : vector<8x128xi32>
    %cst_9 = arith.constant 0.000000e+00 : f32
    %21 = vector.broadcast %cst_9 : f32 to vector<8x128xf32>
    %22 = arith.select %20, %7, %21 : vector<8x128xi1>, vector<8x128xf32>
    %cst_10 = arith.constant dense<0.000000e+00> : vector<8xf32>
    %23 = vector.multi_reduction <add>, %22, %cst_10 [1] : vector<8x128xf32> to vector<8xf32>
    %24 = vector.shape_cast %23 : vector<8xf32> to vector<8x1xf32>
    %25 = arith.subf %17, %24 : vector<8x1xf32>
    %c8_i32 = arith.constant 8 : i32
    %26 = arith.muli %arg0, %c8_i32 : i32
    %27 = tpu.iota {dimensions = array<i32: 0>} : vector<8x1xi32>
    %28 = vector.broadcast %26 : i32 to vector<8x1xi32>
    %29 = arith.addi %28, %27 : vector<8x1xi32>
    %c16_i32 = arith.constant 16 : i32
    %30 = vector.broadcast %c16_i32 : i32 to vector<8x1xi32>
    %31 = arith.cmpi slt, %29, %30 : vector<8x1xi32>
    %cst_11 = arith.constant 0.000000e+00 : f32
    %32 = vector.broadcast %cst_11 : f32 to vector<8x1xf32>
    %33 = arith.select %31, %25, %32 : vector<8x1xi1>, vector<8x1xf32>
    %cst_12 = arith.constant dense<0.000000e+00> : vector<1xf32>
    %34 = vector.multi_reduction <add>, %33, %cst_12 [0] : vector<8x1xf32> to vector<1xf32>
    %35 = vector.shape_cast %34 : vector<1xf32> to vector<1x1xf32>
    %cst_13 = arith.constant 0.000000e+00 : f32
    %36 = vector.broadcast %cst_13 : f32 to vector<8x128xf32>
    %37 = vector.broadcast %35 : vector<1x1xf32> to vector<8x128xf32>
    %38 = arith.addf %36, %37 : vector<8x128xf32>
    %c0_14 = arith.constant 0 : index
    %c0_15 = arith.constant 0 : index
    %39 = vector.load %arg5[%c0_14, %c0_15] : memref<8x128xf32, #tpu.memory_space<vmem>>, vector<8x128xf32>
    tpu.vector_store %arg5[%c0_14, %c0_15], %38 {strides = array<i32>} : memref<8x128xf32, #tpu.memory_space<vmem>>, vector<8x128xf32>,
    return
  }
  func.func @transform_0(%arg0: i32) -> (i32, i32) {
    %c0_i32 = arith.constant 0 : i32
    %c0_i32_0 = arith.constant 0 : i32
    return %arg0, %c0_i32 : i32, i32
  }
  func.func @transform_1(%arg0: i32) -> (i32, i32) {
    %c0_i32 = arith.constant 0 : i32
    %c0_i32_0 = arith.constant 0 : i32
    return %arg0, %c0_i32 : i32, i32
  }
  func.func @transform_2(%arg0: i32) -> (i32, i32) {
    %c0_i32 = arith.constant 0 : i32
    %c0_i32_0 = arith.constant 0 : i32
    %c0_i32_1 = arith.constant 0 : i32
    return %c0_i32, %c0_i32_0 : i32, i32
  }
  func.func @transform_3(%arg0: i32) -> (i32, i32) {
    %c0_i32 = arith.constant 0 : i32
    %c0_i32_0 = arith.constant 0 : i32
    return %arg0, %c0_i32 : i32, i32
  }
  func.func @transform_4(%arg0: i32) -> (i32, i32) {
    %c0_i32 = arith.constant 0 : i32
    %c0_i32_0 = arith.constant 0 : i32
    return %arg0, %c0_i32 : i32, i32
  }
}

</mosaic_0001>

<llo_original>
// kernel: tpu_custom_call.1
$region0: #{tpu_custom_call.1}
  #allocation0 [shape = 'u32[]', space=smem, size = 0x4, offset = 0x4, fixed_abs, tag = 'smem constant byte address 0x4 - core index']
  #allocation1 [shape = 'u32[144,128]{1,0:T(1,128)}', space=vmem, size = 0x12000, scoped, tag = 'internal scratch']
  %s0 = inlined_call_operand.vmem [shape: s32[16,1], index: 0, kind: input, shape index: {}]
  %s1 = inlined_call_operand.vmem [shape: s32[16,1], index: 1, kind: input, shape index: {}]
  %s2 = inlined_call_operand.hbm [shape: f32[128,128], index: 2, kind: input, shape index: {}]
  %s3 = inlined_call_operand.hbm [shape: f32[16,128], index: 3, kind: output, shape index: {0}]
  %s4 = inlined_call_operand.hbm [shape: f32[16,128], index: 4, kind: output, shape index: {1}]
  %5 = xla_tuple %s3, %s4
  %s6 = sld [smem:[#allocation0]]
  $region57: #{tpu_custom_call.1} parent=0
    _
  %s8 = ssub.s32 1, %s6
  %s9 = scalar_select 0, %s8, %s6
  $region1: #{tpu_custom_call.1} parent=0
    #allocation2 [shape = 'u8[65536]{0}', space=vmem, size = 0x10000, scoped, tag = 'input window, operand 2, single buffered']
    #allocation3 [shape = 's32[2]{0}', space=sflag, size = 0x8, scoped, tag = 'scoped memory for tpu_custom_call.1']
    #allocation4 [shape = 's32[2]{0}', space=sflag, size = 0x8, scoped, tag = 'scoped memory for tpu_custom_call.1']
    #allocation5 [shape = 'u8[8192]{0}', space=vmem, size = 0x2000, scoped, tag = 'output window, operand 0']
    #allocation6 [shape = 'u8[8192]{0}', space=vmem, size = 0x2000, scoped, tag = 'output window, operand 1']
    #allocation7 [shape = 's32[2]{0}', space=sflag, size = 0x8, scoped, tag = 'scoped memory for tpu_custom_call.1']
    %10 = vsyncpa [#allocation3], 0
    %11 = vsyncpa [#allocation4], 0
    %s12 = scalar_lea.sflag [#allocation4], 1
    %13 = vsyncpa %s12, 0
    %14 = vsyncpa [#allocation7], 0
    %s15 = scalar_lea.sflag [#allocation7], 1
    %16 = vsyncpa %s15, 0
    loop: start=0, step=1, limit=4
    $region2: #{tpu_custom_call.1} parent=1 // loop_pre_header
      _
    $region3: #{tpu_custom_call.1} parent=1 // loop_header
      %s18 = sphi 0, %s22
      %p19 = scmp.ge.s32.totalorder %s18, 4
      %s28 = sphi 0, %s30
      %s31 = sphi 0, %s28
      %s32 = sphi 0, %s31
      %s48 = sphi 0, %s32
      %s54 = sphi 0, %s56
      %s57 = sphi 0, %s54
      %s58 = sphi 0, %s57
      %s74 = sphi 0, %s58
      %s78 = sphi 0, %s78
      %s80 = sphi 0, %s78
      %s81 = sphi 0, %s80
      %s95 = sphi 0, %s81
      %s101 = sphi 0, %s103
      %s104 = sphi 0, %s101
      %s105 = sphi 0, %s104
      %s121 = sphi 0, %s105
      %s127 = sphi 0, %s129
      %s130 = sphi 0, %s127
      %s131 = sphi 0, %s130
      %s147 = sphi 0, %s131
    $region4: #{tpu_custom_call.1} parent=1 // loop_header_branch
      %21 = sbr.rel (%p19) target = $region8
    $region5: #{tpu_custom_call.1} parent=1 // loop_body
      %s23 = ssub.s32 %s18, 1
      %s24 = ssub.s32 %s18, 2
      %s25 = sadd.s32 %s18, 1
      %s26 = ssub.s32 %s18, %s25
      %p27 = scmp.eq.s32.totalorder %s26, 0
      %s29 = sadd.s32 %s28, 1
      %s30 = scalar_select %p27, %s28, %s29
      %p33 = pneg %p27
      %p34 = scmp.eq.s32.totalorder %s18, 1
      %p35 = por %p33, %p34
      %p36 = scmp.ne.s32.totalorder %s28, %s31
      %p37 = scmp.eq.s32.totalorder %s18, 0
      %p38 = por %p36, %p37
      %p39 = scmp.ne.s32.totalorder %s28, %s31
      %p40 = scmp.eq.s32.totalorder %s23, 1
      %p41 = por %p39, %p40
      %p42 = scmp.ne.s32.totalorder %s31, %s32
      %p43 = scmp.eq.s32.totalorder %s23, 0
      %p44 = por %p42, %p43
      %p45 = scmp.ne.s32.totalorder %s31, %s32
      %p46 = scmp.eq.s32.totalorder %s24, 1
      %p47 = por %p45, %p46
      %p49 = scmp.ne.s32.totalorder %s32, %s48
      %p50 = scmp.eq.s32.totalorder %s24, 0
      %p51 = por %p49, %p50
      %s52 = ssub.s32 %s18, %s25
      %p53 = scmp.eq.s32.totalorder %s52, 0
      %s55 = sadd.s32 %s54, 1
      %s56 = scalar_select %p53, %s54, %s55
      %p59 = pneg %p53
      %p60 = scmp.eq.s32.totalorder %s18, 1
      %p61 = por %p59, %p60
      %p62 = scmp.ne.s32.totalorder %s54, %s57
      %p63 = scmp.eq.s32.totalorder %s18, 0
      %p64 = por %p62, %p63
      %p65 = scmp.ne.s32.totalorder %s54, %s57
      %p66 = scmp.eq.s32.totalorder %s23, 1
      %p67 = por %p65, %p66
      %p68 = scmp.ne.s32.totalorder %s57, %s58
      %p69 = scmp.eq.s32.totalorder %s23, 0
      %p70 = por %p68, %p69
      %p71 = scmp.ne.s32.totalorder %s57, %s58
      %p72 = scmp.eq.s32.totalorder %s24, 1
      %p73 = por %p71, %p72
      %p75 = scmp.ne.s32.totalorder %s58, %s74
      %p76 = scmp.eq.s32.totalorder %s24, 0
      %p77 = por %p75, %p76
      %s79 = sadd.s32 %s78, 1
      %p82 = scmp.eq.s32.totalorder %s18, 1
      %p83 = scmp.ne.s32.totalorder %s78, %s80
      %p84 = scmp.eq.s32.totalorder %s18, 0
      %p85 = por %p83, %p84
      %p86 = scmp.ne.s32.totalorder %s78, %s80
      %p87 = scmp.eq.s32.totalorder %s23, 1
      %p88 = por %p86, %p87
      %p89 = scmp.ne.s32.totalorder %s80, %s81
      %p90 = scmp.eq.s32.totalorder %s23, 0
      %p91 = por %p89, %p90
      %p92 = scmp.ne.s32.totalorder %s80, %s81
      %p93 = scmp.eq.s32.totalorder %s24, 1
      %p94 = por %p92, %p93
      %p96 = scmp.ne.s32.totalorder %s81, %s95
      %p97 = scmp.eq.s32.totalorder %s24, 0
      %p98 = por %p96, %p97
      %s99 = ssub.s32 %s18, %s25
      %p100 = scmp.eq.s32.totalorder %s99, 0
      %s102 = sadd.s32 %s101, 1
      %s103 = scalar_select %p100, %s101, %s102
      %p106 = pneg %p100
      %p107 = scmp.eq.s32.totalorder %s18, 1
      %p108 = por %p106, %p107
      %p109 = scmp.ne.s32.totalorder %s101, %s104
      %p110 = scmp.eq.s32.totalorder %s18, 0
      %p111 = por %p109, %p110
      %p112 = scmp.ne.s32.totalorder %s101, %s104
      %p113 = scmp.eq.s32.totalorder %s23, 1
      %p114 = por %p112, %p113
      %p115 = scmp.ne.s32.totalorder %s104, %s105
      %p116 = scmp.eq.s32.totalorder %s23, 0
      %p117 = por %p115, %p116
      %p118 = scmp.ne.s32.totalorder %s104, %s105
      %p119 = scmp.eq.s32.totalorder %s24, 1
      %p120 = por %p118, %p119
      %p122 = scmp.ne.s32.totalorder %s105, %s121
      %p123 = scmp.eq.s32.totalorder %s24, 0
      %p124 = por %p122, %p123
      %s125 = ssub.s32 %s18, %s25
      %p126 = scmp.eq.s32.totalorder %s125, 0
      %s128 = sadd.s32 %s127, 1
      %s129 = scalar_select %p126, %s127, %s128
      %p132 = pneg %p126
      %p133 = scmp.eq.s32.totalorder %s18, 1
      %p134 = por %p132, %p133
      %p135 = scmp.ne.s32.totalorder %s127, %s130
      %p136 = scmp.eq.s32.totalorder %s18, 0
      %p137 = por %p135, %p136
      %p138 = scmp.ne.s32.totalorder %s127, %s130
      %p139 = scmp.eq.s32.totalorder %s23, 1
      %p140 = por %p138, %p139
      %p141 = scmp.ne.s32.totalorder %s130, %s131
      %p142 = scmp.eq.s32.totalorder %s23, 0
      %p143 = por %p141, %p142
      %p144 = scmp.ne.s32.totalorder %s130, %s131
      %p145 = scmp.eq.s32.totalorder %s24, 1
      %p146 = por %p144, %p145
      %p148 = scmp.ne.s32.totalorder %s131, %s147
      %p149 = scmp.eq.s32.totalorder %s24, 0
      %p150 = por %p148, %p149
      %p151 = scmp.le.s32.totalorder 1, %s18
      %p152 = scmp.lt.s32.totalorder %s18, 3
      %p153 = pnand %p151, %p152
      %p154 = pneg %p153
      // Predicated region
      $region9: #{tpu_custom_call.1} parent=5 // pred_check
        _
      $region10: #{tpu_custom_call.1} parent=5 // pred_check_branch
        %156 = sbr.rel (%p153) target = $region12
      $region11: #{tpu_custom_call.1} parent=5 // pred_region
        %s157 = ssub.s32 %s18, 1
        // Predicated region
        $region13: #{tpu_custom_call.1} parent=11 // pred_check
          %p158 = pneg %p91
        $region14: #{tpu_custom_call.1} parent=11 // pred_check_branch
          %160 = sbr.rel (%p158) target = $region16
        $region15: #{tpu_custom_call.1} parent=11 // pred_region
          %s162 = ssub.s32 2048, 2048
          %163 = vsyncadd [#allocation3], %s162
          %s164 = sshll.u32 [#allocation2], 4
          %s165 = int_to_ptr.vmem [resolvable:$true] %s164
          %170 = dma.hbm_to_vmem [thread:$0]  %s2, 2048, %s165, [#allocation3], 128, 128, 8
        $region16: #{tpu_custom_call.1} parent=11 // pred_fallthru
          _
      $region12: #{tpu_custom_call.1} parent=5 // pred_fallthru
        _
      %p171 = scmp.lt.s32.totalorder %s18, 2
      // Predicated region
      $region17: #{tpu_custom_call.1} parent=5 // pred_check
        %p172 = pneg %p171
      $region18: #{tpu_custom_call.1} parent=5 // pred_check_branch
        %174 = sbr.rel (%p172) target = $region20
      $region19: #{tpu_custom_call.1} parent=5 // pred_region
        // Predicated region
        $region21: #{tpu_custom_call.1} parent=19 // pred_check
          %p175 = pneg %p38
        $region22: #{tpu_custom_call.1} parent=19 // pred_check_branch
          %177 = sbr.rel (%p175) target = $region24
        $region23: #{tpu_custom_call.1} parent=19 // pred_region
          %p178 = scmp.lt.s32.totalorder %s18, 1
          %s179 = scalar_select %p178, %s18, 1
          %s180 = smul.addr %s179, 8
          %s181 = scalar_lea.vmem %s0, %s180
        $region24: #{tpu_custom_call.1} parent=19 // pred_fallthru
          _
        // Predicated region
        $region25: #{tpu_custom_call.1} parent=19 // pred_check
          %p182 = pneg %p64
        $region26: #{tpu_custom_call.1} parent=19 // pred_check_branch
          %184 = sbr.rel (%p182) target = $region28
        $region27: #{tpu_custom_call.1} parent=19 // pred_region
          %p185 = scmp.lt.s32.totalorder %s18, 1
          %s186 = scalar_select %p185, %s18, 1
          %s187 = smul.addr %s186, 8
          %s188 = scalar_lea.vmem %s1, %s187
        $region28: #{tpu_custom_call.1} parent=19 // pred_fallthru
          _
      $region20: #{tpu_custom_call.1} parent=5 // pred_fallthru
        _
      %p189 = scmp.le.s32.totalorder 1, %s18
      %p190 = scmp.lt.s32.totalorder %s18, 3
      %p191 = pnand %p189, %p190
      %p192 = pneg %p191
      // Predicated region
      $region29: #{tpu_custom_call.1} parent=5 // pred_check
        _
      $region30: #{tpu_custom_call.1} parent=5 // pred_check_branch
        %194 = sbr.rel (%p191) target = $region32
      $region31: #{tpu_custom_call.1} parent=5 // pred_region
        %s195 = ssub.s32 %s18, 1
        // Predicated region
        $region33: #{tpu_custom_call.1} parent=31 // pred_check
          %p196 = pneg %p91
        $region34: #{tpu_custom_call.1} parent=31 // pred_check_branch
          %198 = sbr.rel (%p196) target = $region36
        $region35: #{tpu_custom_call.1} parent=31 // pred_region
          %199 = dma.done [#allocation3], 2048
        $region36: #{tpu_custom_call.1} parent=31 // pred_fallthru
          _
        %p200 = scmp.lt.s32.totalorder %s23, 1
        %s201 = scalar_select %p200, %s23, 1
        %s202 = smul.addr %s201, 8
        %s203 = scalar_lea.vmem %s0, %s202
        %p204 = pneg %p44
        %p205 = pneg %p41
        %p206 = scmp.lt.s32.totalorder %s23, 1
        %s207 = scalar_select %p206, %s23, 1
        %s208 = smul.addr %s207, 8
        %s209 = scalar_lea.vmem %s1, %s208
        %p210 = pneg %p70
        %p211 = pneg %p67
        %p212 = pneg %p91
        %p213 = pneg %p88
        %p214 = pneg %p117
        %p215 = pneg %p114
        %s216 = sand.u32 %s104, 1
        %s217 = scalar_lea.sflag [#allocation4], %s216
        %s218 = sand.u32 %s104, 1
        %s219 = smul.addr %s218, 8
        %s220 = scalar_lea.vmem [#allocation5], %s219
        %p221 = pneg %p143
        %p222 = pneg %p140
        %s223 = sand.u32 %s130, 1
        %s224 = scalar_lea.sflag [#allocation7], %s223
        %s225 = sand.u32 %s130, 1
        %s226 = smul.addr %s225, 8
        %s227 = scalar_lea.vmem [#allocation6], %s226
        %p228 = scmp.lt.s32.totalorder %s23, 1
        %s229 = scalar_select %p228, %s23, 1
        %s230 = smul.addr %s229, 8
        %s231 = scalar_lea.vmem %s0, %s230
        %p232 = scmp.lt.s32.totalorder %s23, 1
        %s233 = scalar_select %p232, %s23, 1
        %s234 = smul.addr %s233, 8
        %s235 = scalar_lea.vmem %s1, %s234
        %v236 = vlaneseq
        %v237 = vand.u32 %v236, 127
        %v238 = vld [vmem:[%s231] sm:$0xff]
        %239 = vset.pattern.permute.xlu0 0
        %240 = vperm.xlu0 %239, %v238
        %v241 = vpop.permute.xlu0 %240
        %vm242 = vcmp.eq.s32.totalorder %v237, %v241
        %v243 = vsel %vm242, 1, 0
        %v244 = vcvt.s32.f32 %v243
        %v245 = vld [vmem:[#allocation2] sm:$0xff]
        %v246 = vld [vmem:[#allocation2 + $0x8] sm:$0xff]
        %v247 = vld [vmem:[#allocation2 + $0x10] sm:$0xff]
        %v248 = vld [vmem:[#allocation2 + $0x18] sm:$0xff]
        %v249 = vld [vmem:[#allocation2 + $0x20] sm:$0xff]
        %v250 = vld [vmem:[#allocation2 + $0x28] sm:$0xff]
        %v251 = vld [vmem:[#allocation2 + $0x30] sm:$0xff]
        %v252 = vld [vmem:[#allocation2 + $0x38] sm:$0xff]
        %v253 = vld [vmem:[#allocation2 + $0x40] sm:$0xff]
        %v254 = vld [vmem:[#allocation2 + $0x48] sm:$0xff]
        %v255 = vld [vmem:[#allocation2 + $0x50] sm:$0xff]
        %v256 = vld [vmem:[#allocation2 + $0x58] sm:$0xff]
        %v257 = vld [vmem:[#allocation2 + $0x60] sm:$0xff]
        %v258 = vld [vmem:[#allocation2 + $0x68] sm:$0xff]
        %v259 = vld [vmem:[#allocation2 + $0x70] sm:$0xff]
        %v260 = vld [vmem:[#allocation2 + $0x78] sm:$0xff]
        %261 = vmatprep.subr.mxu0 0.0
        %262 = vmatpush1.msra.mxu0 %v245
        %263 = vmatprep.subr.mxu0 0.0
        %264 = vmatpush1.msra.mxu0 %v246
        %265 = vmatprep.subr.mxu0 0.0
        %266 = vmatpush1.msra.mxu0 %v247
        %267 = vmatprep.subr.mxu0 0.0
        %268 = vmatpush1.msra.mxu0 %v248
        %269 = vmatprep.subr.mxu0 0.0
        %270 = vmatpush1.msra.mxu0 %v249
        %271 = vmatprep.subr.mxu0 0.0
        %272 = vmatpush1.msra.mxu0 %v250
        %273 = vmatprep.subr.mxu0 0.0
        %274 = vmatpush1.msra.mxu0 %v251
        %275 = vmatprep.subr.mxu0 0.0
        %276 = vmatpush1.msra.mxu0 %v252
        %277 = vmatprep.subr.mxu0 0.0
        %278 = vmatpush1.msra.mxu0 %v253
        %279 = vmatprep.subr.mxu0 0.0
        %280 = vmatpush1.msra.mxu0 %v254
        %281 = vmatprep.subr.mxu0 0.0
        %282 = vmatpush1.msra.mxu0 %v255
        %283 = vmatprep.subr.mxu0 0.0
        %284 = vmatpush1.msra.mxu0 %v256
        %285 = vmatprep.subr.mxu0 0.0
        %286 = vmatpush1.msra.mxu0 %v257
        %287 = vmatprep.subr.mxu0 0.0
        %288 = vmatpush1.msra.mxu0 %v258
        %289 = vmatprep.subr.mxu0 0.0
        %290 = vmatpush1.msra.mxu0 %v259
        %291 = vmatprep.subr.mxu0 0.0
        %292 = vmatpush1.msra.mxu0 %v260
        %293 = vmatprep.subr.mxu0 0.0
        %294 = vmatpush1.msra.mxu0 0.0
        %295 = vmatprep.subr.mxu0 0.0
        %296 = vmatpush1.msra.mxu0 0.0
        %297 = vmatprep.subr.mxu0 0.0
        %298 = vmatpush1.msra.mxu0 0.0
        %299 = vmatprep.subr.mxu0 0.0
        %300 = vmatpush1.msra.mxu0 0.0
        %301 = vmatprep.subr.mxu0 0.0
        %302 = vmatpush1.msra.mxu0 0.0
        %303 = vmatprep.subr.mxu0 0.0
        %304 = vmatpush1.msra.mxu0 0.0
        %305 = vmatprep.subr.mxu0 0.0
        %306 = vmatpush1.msra.mxu0 0.0
        %307 = vmatprep.subr.mxu0 0.0
        %308 = vmatpush1.msra.mxu0 0.0
        %309 = vmatprep.subr.mxu0 0.0
        %310 = vmatpush1.msra.mxu0 0.0
        %311 = vmatprep.subr.mxu0 0.0
        %312 = vmatpush1.msra.mxu0 0.0
        %313 = vmatprep.subr.mxu0 0.0
        %314 = vmatpush1.msra.mxu0 0.0
        %315 = vmatprep.subr.mxu0 0.0
        %316 = vmatpush1.msra.mxu0 0.0
        %317 = vmatprep.subr.mxu0 0.0
        %318 = vmatpush1.msra.mxu0 0.0
        %319 = vmatprep.subr.mxu0 0.0
        %320 = vmatpush1.msra.mxu0 0.0
        %321 = vmatprep.subr.mxu0 0.0
        %322 = vmatpush1.msra.mxu0 0.0
        %323 = vmatprep.subr.mxu0 0.0
        %324 = vmatpush1.msra.mxu0 0.0
        %325 = vmatprep.mubr.f32.mxu0 0.0
        %326 = vmatmul.mubr.f32.gmra.mrb[0].mxu0 %v244
        %v327 = vpop.f32.mrb[0].mxu0
        %v328 = vadd.f32 0.0, %v327
        %v329 = vpop.f32.mrb[0].mxu0
        %330 = vdwg.mxu0
        %331 = vst [vmem:[%s220] sm:$0xff] %v328
        %332 = vmax.xlane.f32.xlu0 %v328
        %v333 = vpop.xlane.xlu0 %332
        %v334 = vsub.f32 %v328, %v333
        %v335 = vmul.f32 %v334, 1.442695
        %v336 = vpow.pop %v335
        %337 = vadd.xlane.f32.xlu0 %v336
        %v338 = vpop.xlane.xlu0 %337
        %v339 = vlog2.pop %v338
        %v340 = vmul.f32 %v339, 0.6931472
        %v341 = vadd.f32 %v333, %v340
        %v342 = vld [vmem:[%s235] sm:$0xff]
        %343 = vset.pattern.permute.xlu0 0
        %344 = vperm.xlu0 %343, %v342
        %v345 = vpop.permute.xlu0 %344
        %vm346 = vcmp.eq.s32.totalorder %v237, %v345
        %v347 = vsel %vm346, %v328, 0.0
        %348 = vadd.xlane.f32.xlu0 %v347
        %v349 = vpop.xlane.xlu0 %348
        %v350 = vsub.f32 %v341, %v349
        %s351 = smul.u32 %s23, 8
        %v352 = vlaneseq
        %v353 = vshrl.u32 %v352, 7
        %v354 = vstv %s351
        %v355 = vadd.s32 %v354, %v353
        %vm356 = vcmp.lt.s32.totalorder %v355, 16
        %v357 = vsel %vm356, %v350, 0.0
        %v358 = vrot.slane %v357, 4
        %v359 = vadd.f32 %v357, %v358
        %v360 = vrot.slane %v359, 2
        %v361 = vadd.f32 %v359, %v360
        %v362 = vrot.slane %v361, 1
        %v363 = vadd.f32 %v361, %v362
        %v364 = vadd.f32 %v363, 0.0
        %365 = vst [vmem:[%s227] sm:$0xff] %v364
        %s366 = sand.u32 %s104, 1
        %s367 = scalar_lea.sflag [#allocation4], %s366
        %s368 = sand.u32 %s104, 1
        %s369 = smul.addr %s368, 8
        %s370 = scalar_lea.vmem [#allocation5], %s369
        %s371 = sand.u32 %s130, 1
        %s372 = scalar_lea.sflag [#allocation7], %s371
        %s373 = sand.u32 %s130, 1
        %s374 = smul.addr %s373, 8
        %s375 = scalar_lea.vmem [#allocation6], %s374
        // Predicated region
        $region37: #{tpu_custom_call.1} parent=31 // pred_check
          %p376 = pneg %p114
        $region38: #{tpu_custom_call.1} parent=31 // pred_check_branch
          %378 = sbr.rel (%p376) target = $region40
        $region39: #{tpu_custom_call.1} parent=31 // pred_region
          %s380 = ssub.s32 128, 128
          %381 = vsyncadd %s367, %s380
          %s382 = smul.addr %s23, 128
          %s383 = scalar_lea.hbm %s3, %s382
          %s385 = sshll.u32 %s370, 4
          %s386 = int_to_ptr.vmem [resolvable:$true] %s385
          %388 = dma.vmem_to_hbm [thread:$0]  %s386, 128, %s383, %s367
        $region40: #{tpu_custom_call.1} parent=31 // pred_fallthru
          _
        // Predicated region
        $region41: #{tpu_custom_call.1} parent=31 // pred_check
          %p389 = pneg %p140
        $region42: #{tpu_custom_call.1} parent=31 // pred_check_branch
          %391 = sbr.rel (%p389) target = $region44
        $region43: #{tpu_custom_call.1} parent=31 // pred_region
          %s393 = ssub.s32 128, 128
          %394 = vsyncadd %s372, %s393
          %s395 = smul.addr %s23, 128
          %s396 = scalar_lea.hbm %s4, %s395
          %s398 = sshll.u32 %s375, 4
          %s399 = int_to_ptr.vmem [resolvable:$true] %s398
          %401 = dma.vmem_to_hbm [thread:$0]  %s399, 128, %s396, %s372
        $region44: #{tpu_custom_call.1} parent=31 // pred_fallthru
          _
      $region32: #{tpu_custom_call.1} parent=5 // pred_fallthru
        _
      %p402 = scmp.le.s32.totalorder 2, %s18
      // Predicated region
      $region45: #{tpu_custom_call.1} parent=5 // pred_check
        %p403 = pneg %p402
      $region46: #{tpu_custom_call.1} parent=5 // pred_check_branch
        %405 = sbr.rel (%p403) target = $region48
      $region47: #{tpu_custom_call.1} parent=5 // pred_region
        %s406 = ssub.s32 %s18, 2
        // Predicated region
        $region49: #{tpu_custom_call.1} parent=47 // pred_check
          %p407 = pneg %p120
        $region50: #{tpu_custom_call.1} parent=47 // pred_check_branch
          %409 = sbr.rel (%p407) target = $region52
        $region51: #{tpu_custom_call.1} parent=47 // pred_region
          %s410 = sand.u32 %s105, 1
          %s411 = scalar_lea.sflag [#allocation4], %s410
          %s412 = sand.u32 %s105, 1
          %s413 = smul.addr %s412, 8
          %s414 = scalar_lea.vmem [#allocation5], %s413
          %415 = dma.done %s411, 128
        $region52: #{tpu_custom_call.1} parent=47 // pred_fallthru
          _
        // Predicated region
        $region53: #{tpu_custom_call.1} parent=47 // pred_check
          %p416 = pneg %p146
        $region54: #{tpu_custom_call.1} parent=47 // pred_check_branch
          %418 = sbr.rel (%p416) target = $region56
        $region55: #{tpu_custom_call.1} parent=47 // pred_region
          %s419 = sand.u32 %s131, 1
          %s420 = scalar_lea.sflag [#allocation7], %s419
          %s421 = sand.u32 %s131, 1
          %s422 = smul.addr %s421, 8
          %s423 = scalar_lea.vmem [#allocation6], %s422
          %424 = dma.done %s420, 128
        $region56: #{tpu_custom_call.1} parent=47 // pred_fallthru
          _
      $region48: #{tpu_custom_call.1} parent=5 // pred_fallthru
        _
    $region6: #{tpu_custom_call.1} parent=1 // loop_footer
      %s22 = sadd.s32 1, %s18
    $region7: #{tpu_custom_call.1} parent=1 // loop_footer_branch
      %17 = sbr.rel target = $region3
    $region8: #{tpu_custom_call.1} parent=1 // loop_exit
      _
    %425 = vsyncpa [#allocation3], 1
    %s426 = scalar_lea.sflag [#allocation3], 1
    %427 = vsyncpa %s426, 1
    %428 = vsyncpa [#allocation4], 1
    %s429 = scalar_lea.sflag [#allocation4], 1
    %430 = vsyncpa %s429, 1
    %431 = vsyncpa [#allocation7], 1
    %s432 = scalar_lea.sflag [#allocation7], 1
    %433 = vsyncpa %s432, 1

</llo_original>
